<compile_context>
chip_gen: v5e
topology: v5e:2x2
jax: 0.10.0
libtpu: 0.0.40
codegen_flags: <defaults>
</compile_context>

<pallas_src>
import functools

import jax
import jax.numpy as jnp
import numpy as np
from jax.experimental import pallas as pl
from jax.experimental.pallas import tpu as pltpu

HIDDEN = 128
N_LAYERS = 6
DEFAULT_TILE_B = 128  # sweep 128/256 on v6e/v7x with bf16 activations


def _inverse_model_kernel(s_ref, ns_ref, w1a_ref, w1b_ref, b1_ref,
                          wa_ref, ba_ref, wf_ref, bf_ref, o_ref, *, act_dtype):
    # s_ref : (TILE_B, state_dim)          ns_ref: (TILE_B, next_dim)
    # w1a   : (state_dim, HIDDEN)          w1b   : (next_dim, HIDDEN)   b1: (1, HIDDEN) f32
    # wa    : (N_LAYERS, HIDDEN, HIDDEN)   ba    : (N_LAYERS, 1, HIDDEN) f32
    # wf    : (HIDDEN, out_features)       bf    : (1, out_features) f32
    s = s_ref[...]
    ns = ns_ref[...]

    # First layer as a split GEMM (replaces the wrapper-side concat); f32 accumulate.
    h = (jnp.dot(s, w1a_ref[...], preferred_element_type=jnp.float32)
         + jnp.dot(ns, w1b_ref[...], preferred_element_type=jnp.float32)
         + b1_ref[...])
    h = jnp.maximum(h, 0.0).astype(act_dtype)

    # 6 residual ReLU blocks, fully unrolled (HIDDEN=128 == one lane width).
    for i in range(N_LAYERS):
        res = jnp.dot(h, wa_ref[i], preferred_element_type=jnp.float32) + ba_ref[i]
        res = jnp.maximum(res, 0.0)
        h = jnp.maximum(h.astype(jnp.float32) + res, 0.0).astype(act_dtype)

    # Final projection (no activation).
    out = jnp.dot(h, wf_ref[...], preferred_element_type=jnp.float32) + bf_ref[...]
    # TODO(synk): out_features=4 -> masked lane stores; pad wf/bf to 128 lanes only
    # if xprof shows store-slot stalls at production batch sizes.
    o_ref[...] = out.astype(o_ref.dtype)


def prepare_params(params, state_dim, weight_dtype=jnp.bfloat16):
    """Split w1 (so the kernel never needs a concat) and cast matmul weights to the
    MXU input dtype.  Biases stay f32 (they are added to the f32 accumulator)."""
    w1, b1, wa, ba, wf, bf = params
    w1a = w1[:state_dim].astype(weight_dtype)
    w1b = w1[state_dim:].astype(weight_dtype)
    return (w1a, w1b, b1.astype(jnp.float32),
            wa.astype(weight_dtype), ba.astype(jnp.float32),
            wf.astype(weight_dtype), bf.astype(jnp.float32))


def inverse_model_forward(state, next_state, kparams, *,
                          act_dtype=jnp.bfloat16,
                          tile_b=DEFAULT_TILE_B,
                          out_dtype=jnp.float32):
    w1a, w1b, b1, wa, ba, wf, bf = kparams
    state_dim = w1a.shape[0]
    next_dim = w1b.shape[0]
    out_features = wf.shape[1]
    batch = state.shape[0]

    # Inputs in the matmul dtype (bf16 for the v6e/v7x fast path, f32 otherwise).
    s = state.astype(w1a.dtype)
    ns = next_state.astype(w1b.dtype)

    # Batch tiling: one grid step per TILE_B rows; pad so every block is full.
    if batch <= tile_b:
        tb = batch                      # single step; block == full array
        padded = batch
    else:
        tb = tile_b
        padded = pl.cdiv(batch, tb) * tb
    if padded != batch:
        s = jnp.pad(s, ((0, padded - batch), (0, 0)))
        ns = jnp.pad(ns, ((0, padded - batch), (0, 0)))
    grid = (padded // tb,)

    weight_bytes = sum(int(np.prod(a.shape)) * a.dtype.itemsize
                       for a in (w1a, w1b, b1, wa, ba, wf, bf))
    act_bytes = (padded * (state_dim + next_dim) * s.dtype.itemsize
                 + padded * out_features * jnp.dtype(out_dtype).itemsize)
    flops = 2 * padded * ((state_dim + next_dim) * HIDDEN
                          + N_LAYERS * HIDDEN * HIDDEN
                          + HIDDEN * out_features)

    kernel = functools.partial(_inverse_model_kernel, act_dtype=act_dtype)

    out = pl.pallas_call(
        kernel,
        out_shape=jax.ShapeDtypeStruct((padded, out_features), out_dtype),
        grid_spec=pltpu.PrefetchScalarGridSpec(
            num_scalar_prefetch=0,
            grid=grid,
            in_specs=[
                # activations: pipelined per batch tile
                pl.BlockSpec((tb, state_dim), lambda i: (i, 0)),
                pl.BlockSpec((tb, next_dim), lambda i: (i, 0)),
                # weights/biases: constant index_map -> fetched once, resident
                pl.BlockSpec((state_dim, HIDDEN), lambda i: (0, 0)),
                pl.BlockSpec((next_dim, HIDDEN), lambda i: (0, 0)),
                pl.BlockSpec((1, HIDDEN), lambda i: (0, 0)),
                pl.BlockSpec((N_LAYERS, HIDDEN, HIDDEN), lambda i: (0, 0, 0)),
                pl.BlockSpec((N_LAYERS, 1, HIDDEN), lambda i: (0, 0, 0)),
                pl.BlockSpec((HIDDEN, out_features), lambda i: (0, 0)),
                pl.BlockSpec((1, out_features), lambda i: (0, 0)),
            ],
            out_specs=pl.BlockSpec((tb, out_features), lambda i: (i, 0)),
        ),
        compiler_params=pltpu.CompilerParams(
            # batch axis is embarrassingly parallel -> 2-TC sharding on v7x
            dimension_semantics=("parallel",),
        ),
        cost_estimate=pl.CostEstimate(
            flops=flops, transcendentals=0,
            bytes_accessed=weight_bytes + act_bytes),
    )(s, ns, w1a, w1b, b1, wa, ba, wf, bf)

    return out[:batch]


# ---------------- init + references (PyTorch semantics) ----------------

def xavier_uniform(key, fan_in, fan_out):
    limit = float(np.sqrt(6.0 / (fan_in + fan_out)))
    return jax.random.uniform(
        key, (fan_in, fan_out), minval=-limit, maxval=limit, dtype=jnp.float32)


def init_params(key, in_features, out_features, hidden_dim=HIDDEN):
    keys = jax.random.split(key, 2 + N_LAYERS)
    w1 = xavier_uniform(keys[0], in_features, hidden_dim)
    b1 = jnp.zeros((1, hidden_dim), jnp.float32)
    wa = jnp.stack(
        [xavier_uniform(keys[1 + i], hidden_dim, hidden_dim) for i in range(N_LAYERS)])
    ba = jnp.zeros((N_LAYERS, 1, hidden_dim), jnp.float32)
    wf = xavier_uniform(keys[1 + N_LAYERS], hidden_dim, out_features)
    bf = jnp.zeros((1, out_features), jnp.float32)
    return (w1, b1, wa, ba, wf, bf)


def reference_forward_f32(state, next_state, params):
    # pure-JAX f32 mirror of the PyTorch forward
    w1, b1, wa, ba, wf, bf = params
    x = jnp.concatenate([state, next_state], axis=-1).astype(jnp.float32)
    h = jnp.maximum(x @ w1 + b1, 0.0)
    for i in range(N_LAYERS):
        res = jnp.maximum(h @ wa[i] + ba[i], 0.0)
        h = jnp.maximum(h + res, 0.0)
    return h @ wf + bf


def reference_forward_kernel_dtypes(state, next_state, kparams, act_dtype):
    # pure-JAX mirror of the kernel's exact dtype pipeline (for bf16 checking)
    w1a, w1b, b1, wa, ba, wf, bf = kparams
    s = state.astype(w1a.dtype)
    ns = next_state.astype(w1b.dtype)
    h = (jnp.dot(s, w1a, preferred_element_type=jnp.float32)
         + jnp.dot(ns, w1b, preferred_element_type=jnp.float32) + b1)
    h = jnp.maximum(h, 0.0).astype(act_dtype)
    for i in range(N_LAYERS):
        res = jnp.maximum(
            jnp.dot(h, wa[i], preferred_element_type=jnp.float32) + ba[i], 0.0)
        h = jnp.maximum(h.astype(jnp.float32) + res, 0.0).astype(act_dtype)
    return jnp.dot(h, wf, preferred_element_type=jnp.float32) + bf


if __name__ == "__main__":
    batch = 2
    state_dim = 8                  # state and next_state each 8 features
    in_features = 2 * state_dim    # concat -> 16
    out_features = 4

    key = jax.random.PRNGKey(0)
    k_state, k_next, k_params = jax.random.split(key, 3)
    state = jax.random.normal(k_state, (batch, state_dim), dtype=jnp.float32)
    next_state = jax.random.normal(k_next, (batch, state_dim), dtype=jnp.float32)
    params = init_params(k_params, in_features, out_features)

    # --- f32 path: exact semantics vs. the PyTorch-equivalent reference ---
    kparams_f32 = prepare_params(params, state_dim, weight_dtype=jnp.float32)
    out_f32 = inverse_model_forward(state, next_state, kparams_f32,
                                    act_dtype=jnp.float32)
    out_f32 = jax.block_until_ready(out_f32)
    np.testing.assert_allclose(
        np.asarray(out_f32),
        np.asarray(reference_forward_f32(state, next_state, params)),
        rtol=1e-4, atol=1e-4)

    # --- bf16 fast path (v6e/v7x): compare against dtype-mirrored reference ---
    kparams_bf16 = prepare_params(params, state_dim, weight_dtype=jnp.bfloat16)
    out_bf16 = inverse_model_forward(state, next_state, kparams_bf16,
                                     act_dtype=jnp.bfloat16)
    out_bf16 = jax.block_until_ready(out_bf16)
    ref_bf16 = reference_forward_kernel_dtypes(
        state, next_state, kparams_bf16, jnp.bfloat16)
    np.testing.assert_allclose(np.asarray(out_bf16), np.asarray(ref_bf16),
                               rtol=2e-2, atol=2e-2)

    print("KERNEL_OK")
</pallas_src>

<mosaic_0001>
module attributes {stable_mosaic.version = 11 : i64} {
  func.func @_inverse_model_kernel(%arg0: i32, %arg1: memref<2x8xf32, #tpu.memory_space<vmem>>, %arg2: memref<2x8xf32, #tpu.memory_space<vmem>>, %arg3: memref<8x128xf32, #tpu.memory_space<vmem>>, %arg4: memref<8x128xf32, #tpu.memory_space<vmem>>, %arg5: memref<1x128xf32, #tpu.memory_space<vmem>>, %arg6: memref<6x128x128xf32, #tpu.memory_space<vmem>>, %arg7: memref<6x1x128xf32, #tpu.memory_space<vmem>>, %arg8: memref<128x4xf32, #tpu.memory_space<vmem>>, %arg9: memref<1x4xf32, #tpu.memory_space<vmem>>, %arg10: memref<2x4xf32, #tpu.memory_space<vmem>>) attributes {dimension_semantics = [#tpu.dimension_semantics<parallel>], iteration_bounds = array<i64: 1>, scalar_prefetch = 0 : i64, scratch_operands = 0 : i64, tpu.core_type = #tpu.core_type<tc>, window_params = [{transform_indices = @transform_0, window_bounds = array<i64: 2, 8>}, {transform_indices = @transform_1, window_bounds = array<i64: 2, 8>}, {pipeline_mode = #tpu.pipeline_mode<synchronous>, transform_indices = @transform_2, window_bounds = array<i64: 8, 128>}, {pipeline_mode = #tpu.pipeline_mode<synchronous>, transform_indices = @transform_3, window_bounds = array<i64: 8, 128>}, {pipeline_mode = #tpu.pipeline_mode<synchronous>, transform_indices = @transform_4, window_bounds = array<i64: 1, 128>}, {pipeline_mode = #tpu.pipeline_mode<synchronous>, transform_indices = @transform_5, window_bounds = array<i64: 6, 128, 128>}, {pipeline_mode = #tpu.pipeline_mode<synchronous>, transform_indices = @transform_6, window_bounds = array<i64: 6, 1, 128>}, {pipeline_mode = #tpu.pipeline_mode<synchronous>, transform_indices = @transform_7, window_bounds = array<i64: 128, 4>}, {pipeline_mode = #tpu.pipeline_mode<synchronous>, transform_indices = @transform_8, window_bounds = array<i64: 1, 4>}, {transform_indices = @transform_9, window_bounds = array<i64: 2, 4>}]} {
    %c0 = arith.constant 0 : index
    %c0_0 = arith.constant 0 : index
    %0 = vector.load %arg1[%c0, %c0_0] : memref<2x8xf32, #tpu.memory_space<vmem>>, vector<2x8xf32>
    %c0_1 = arith.constant 0 : index
    %c0_2 = arith.constant 0 : index
    %1 = vector.load %arg2[%c0_1, %c0_2] : memref<2x8xf32, #tpu.memory_space<vmem>>, vector<2x8xf32>
    %c0_3 = arith.constant 0 : index
    %c0_4 = arith.constant 0 : index
    %2 = vector.load %arg3[%c0_3, %c0_4] : memref<8x128xf32, #tpu.memory_space<vmem>>, vector<8x128xf32>
    %cst = arith.constant dense<0.000000e+00> : vector<2x128xf32>
    %3 = tpu.matmul %0, %2, %cst {dimension_numbers = #tpu.dot_dimension_numbers<[1], [0], [0], [1], [0, 0, 1, 1], [], []>} : vector<2x8xf32>, vector<8x128xf32>, vector<2x128xf32> -> vector<2x128xf32>
    %c0_5 = arith.constant 0 : index
    %c0_6 = arith.constant 0 : index
    %4 = vector.load %arg4[%c0_5, %c0_6] : memref<8x128xf32, #tpu.memory_space<vmem>>, vector<8x128xf32>
    %cst_7 = arith.constant dense<0.000000e+00> : vector<2x128xf32>
    %5 = tpu.matmul %1, %4, %cst_7 {dimension_numbers = #tpu.dot_dimension_numbers<[1], [0], [0], [1], [0, 0, 1, 1], [], []>} : vector<2x8xf32>, vector<8x128xf32>, vector<2x128xf32> -> vector<2x128xf32>
    %6 = arith.addf %3, %5 : vector<2x128xf32>
    %c0_8 = arith.constant 0 : index
    %c0_9 = arith.constant 0 : index
    %7 = vector.load %arg5[%c0_8, %c0_9] : memref<1x128xf32, #tpu.memory_space<vmem>>, vector<1x128xf32>
    %8 = vector.broadcast %7 : vector<1x128xf32> to vector<2x128xf32>
    %9 = arith.addf %6, %8 : vector<2x128xf32>
    %cst_10 = arith.constant 0.000000e+00 : f32
    %10 = vector.broadcast %cst_10 : f32 to vector<2x128xf32>
    %11 = arith.maximumf %9, %10 : vector<2x128xf32>
    %c0_11 = arith.constant 0 : index
    %c0_12 = arith.constant 0 : index
    %c0_13 = arith.constant 0 : index
    %12 = vector.load %arg6[%c0_11, %c0_12, %c0_13] : memref<6x128x128xf32, #tpu.memory_space<vmem>>, vector<1x128x128xf32>
    %13 = vector.shape_cast %12 : vector<1x128x128xf32> to vector<128x128xf32>
    %cst_14 = arith.constant dense<0.000000e+00> : vector<2x128xf32>
    %14 = tpu.matmul %11, %13, %cst_14 {dimension_numbers = #tpu.dot_dimension_numbers<[1], [0], [0], [1], [0, 0, 1, 1], [], []>} : vector<2x128xf32>, vector<128x128xf32>, vector<2x128xf32> -> vector<2x128xf32>
    %c0_15 = arith.constant 0 : index
    %c0_16 = arith.constant 0 : index
    %c0_17 = arith.constant 0 : index
    %15 = vector.load %arg7[%c0_15, %c0_16, %c0_17] : memref<6x1x128xf32, #tpu.memory_space<vmem>>, vector<1x1x128xf32>
    %16 = vector.shape_cast %15 : vector<1x1x128xf32> to vector<1x128xf32>
    %17 = vector.broadcast %16 : vector<1x128xf32> to vector<2x128xf32>
    %18 = arith.addf %14, %17 : vector<2x128xf32>
    %cst_18 = arith.constant 0.000000e+00 : f32
    %19 = vector.broadcast %cst_18 : f32 to vector<2x128xf32>
    %20 = arith.maximumf %18, %19 : vector<2x128xf32>
    %21 = arith.addf %11, %20 : vector<2x128xf32>
    %cst_19 = arith.constant 0.000000e+00 : f32
    %22 = vector.broadcast %cst_19 : f32 to vector<2x128xf32>
    %23 = arith.maximumf %21, %22 : vector<2x128xf32>
    %c1 = arith.constant 1 : index
    %c0_20 = arith.constant 0 : index
    %c0_21 = arith.constant 0 : index
    %24 = vector.load %arg6[%c1, %c0_20, %c0_21] : memref<6x128x128xf32, #tpu.memory_space<vmem>>, vector<1x128x128xf32>
    %25 = vector.shape_cast %24 : vector<1x128x128xf32> to vector<128x128xf32>
    %cst_22 = arith.constant dense<0.000000e+00> : vector<2x128xf32>
    %26 = tpu.matmul %23, %25, %cst_22 {dimension_numbers = #tpu.dot_dimension_numbers<[1], [0], [0], [1], [0, 0, 1, 1], [], []>} : vector<2x128xf32>, vector<128x128xf32>, vector<2x128xf32> -> vector<2x128xf32>
    %c1_23 = arith.constant 1 : index
    %c0_24 = arith.constant 0 : index
    %c0_25 = arith.constant 0 : index
    %27 = vector.load %arg7[%c1_23, %c0_24, %c0_25] : memref<6x1x128xf32, #tpu.memory_space<vmem>>, vector<1x1x128xf32>
    %28 = vector.shape_cast %27 : vector<1x1x128xf32> to vector<1x128xf32>
    %29 = vector.broadcast %28 : vector<1x128xf32> to vector<2x128xf32>
    %30 = arith.addf %26, %29 : vector<2x128xf32>
    %cst_26 = arith.constant 0.000000e+00 : f32
    %31 = vector.broadcast %cst_26 : f32 to vector<2x128xf32>
    %32 = arith.maximumf %30, %31 : vector<2x128xf32>
    %33 = arith.addf %23, %32 : vector<2x128xf32>
    %cst_27 = arith.constant 0.000000e+00 : f32
    %34 = vector.broadcast %cst_27 : f32 to vector<2x128xf32>
    %35 = arith.maximumf %33, %34 : vector<2x128xf32>
    %c2 = arith.constant 2 : index
    %c0_28 = arith.constant 0 : index
    %c0_29 = arith.constant 0 : index
    %36 = vector.load %arg6[%c2, %c0_28, %c0_29] : memref<6x128x128xf32, #tpu.memory_space<vmem>>, vector<1x128x128xf32>
    %37 = vector.shape_cast %36 : vector<1x128x128xf32> to vector<128x128xf32>
    %cst_30 = arith.constant dense<0.000000e+00> : vector<2x128xf32>
    %38 = tpu.matmul %35, %37, %cst_30 {dimension_numbers = #tpu.dot_dimension_numbers<[1], [0], [0], [1], [0, 0, 1, 1], [], []>} : vector<2x128xf32>, vector<128x128xf32>, vector<2x128xf32> -> vector<2x128xf32>
    %c2_31 = arith.constant 2 : index
    %c0_32 = arith.constant 0 : index
    %c0_33 = arith.constant 0 : index
    %39 = vector.load %arg7[%c2_31, %c0_32, %c0_33] : memref<6x1x128xf32, #tpu.memory_space<vmem>>, vector<1x1x128xf32>
    %40 = vector.shape_cast %39 : vector<1x1x128xf32> to vector<1x128xf32>
    %41 = vector.broadcast %40 : vector<1x128xf32> to vector<2x128xf32>
    %42 = arith.addf %38, %41 : vector<2x128xf32>
    %cst_34 = arith.constant 0.000000e+00 : f32
    %43 = vector.broadcast %cst_34 : f32 to vector<2x128xf32>
    %44 = arith.maximumf %42, %43 : vector<2x128xf32>
    %45 = arith.addf %35, %44 : vector<2x128xf32>
    %cst_35 = arith.constant 0.000000e+00 : f32
    %46 = vector.broadcast %cst_35 : f32 to vector<2x128xf32>
    %47 = arith.maximumf %45, %46 : vector<2x128xf32>
    %c3 = arith.constant 3 : index
    %c0_36 = arith.constant 0 : index
    %c0_37 = arith.constant 0 : index
    %48 = vector.load %arg6[%c3, %c0_36, %c0_37] : memref<6x128x128xf32, #tpu.memory_space<vmem>>, vector<1x128x128xf32>
    %49 = vector.shape_cast %48 : vector<1x128x128xf32> to vector<128x128xf32>
    %cst_38 = arith.constant dense<0.000000e+00> : vector<2x128xf32>
    %50 = tpu.matmul %47, %49, %cst_38 {dimension_numbers = #tpu.dot_dimension_numbers<[1], [0], [0], [1], [0, 0, 1, 1], [], []>} : vector<2x128xf32>, vector<128x128xf32>, vector<2x128xf32> -> vector<2x128xf32>
    %c3_39 = arith.constant 3 : index
    %c0_40 = arith.constant 0 : index
    %c0_41 = arith.constant 0 : index
    %51 = vector.load %arg7[%c3_39, %c0_40, %c0_41] : memref<6x1x128xf32, #tpu.memory_space<vmem>>, vector<1x1x128xf32>
    %52 = vector.shape_cast %51 : vector<1x1x128xf32> to vector<1x128xf32>
    %53 = vector.broadcast %52 : vector<1x128xf32> to vector<2x128xf32>
    %54 = arith.addf %50, %53 : vector<2x128xf32>
    %cst_42 = arith.constant 0.000000e+00 : f32
    %55 = vector.broadcast %cst_42 : f32 to vector<2x128xf32>
    %56 = arith.maximumf %54, %55 : vector<2x128xf32>
    %57 = arith.addf %47, %56 : vector<2x128xf32>
    %cst_43 = arith.constant 0.000000e+00 : f32
    %58 = vector.broadcast %cst_43 : f32 to vector<2x128xf32>
    %59 = arith.maximumf %57, %58 : vector<2x128xf32>
    %c4 = arith.constant 4 : index
    %c0_44 = arith.constant 0 : index
    %c0_45 = arith.constant 0 : index
    %60 = vector.load %arg6[%c4, %c0_44, %c0_45] : memref<6x128x128xf32, #tpu.memory_space<vmem>>, vector<1x128x128xf32>
    %61 = vector.shape_cast %60 : vector<1x128x128xf32> to vector<128x128xf32>
    %cst_46 = arith.constant dense<0.000000e+00> : vector<2x128xf32>
    %62 = tpu.matmul %59, %61, %cst_46 {dimension_numbers = #tpu.dot_dimension_numbers<[1], [0], [0], [1], [0, 0, 1, 1], [], []>} : vector<2x128xf32>, vector<128x128xf32>, vector<2x128xf32> -> vector<2x128xf32>
    %c4_47 = arith.constant 4 : index
    %c0_48 = arith.constant 0 : index
    %c0_49 = arith.constant 0 : index
    %63 = vector.load %arg7[%c4_47, %c0_48, %c0_49] : memref<6x1x128xf32, #tpu.memory_space<vmem>>, vector<1x1x128xf32>
    %64 = vector.shape_cast %63 : vector<1x1x128xf32> to vector<1x128xf32>
    %65 = vector.broadcast %64 : vector<1x128xf32> to vector<2x128xf32>
    %66 = arith.addf %62, %65 : vector<2x128xf32>
    %cst_50 = arith.constant 0.000000e+00 : f32
    %67 = vector.broadcast %cst_50 : f32 to vector<2x128xf32>
    %68 = arith.maximumf %66, %67 : vector<2x128xf32>
    %69 = arith.addf %59, %68 : vector<2x128xf32>
    %cst_51 = arith.constant 0.000000e+00 : f32
    %70 = vector.broadcast %cst_51 : f32 to vector<2x128xf32>
    %71 = arith.maximumf %69, %70 : vector<2x128xf32>
    %c5 = arith.constant 5 : index
    %c0_52 = arith.constant 0 : index
    %c0_53 = arith.constant 0 : index
    %72 = vector.load %arg6[%c5, %c0_52, %c0_53] : memref<6x128x128xf32, #tpu.memory_space<vmem>>, vector<1x128x128xf32>
    %73 = vector.shape_cast %72 : vector<1x128x128xf32> to vector<128x128xf32>
    %cst_54 = arith.constant dense<0.000000e+00> : vector<2x128xf32>
    %74 = tpu.matmul %71, %73, %cst_54 {dimension_numbers = #tpu.dot_dimension_numbers<[1], [0], [0], [1], [0, 0, 1, 1], [], []>} : vector<2x128xf32>, vector<128x128xf32>, vector<2x128xf32> -> vector<2x128xf32>
    %c5_55 = arith.constant 5 : index
    %c0_56 = arith.constant 0 : index
    %c0_57 = arith.constant 0 : index
    %75 = vector.load %arg7[%c5_55, %c0_56, %c0_57] : memref<6x1x128xf32, #tpu.memory_space<vmem>>, vector<1x1x128xf32>
    %76 = vector.shape_cast %75 : vector<1x1x128xf32> to vector<1x128xf32>
    %77 = vector.broadcast %76 : vector<1x128xf32> to vector<2x128xf32>
    %78 = arith.addf %74, %77 : vector<2x128xf32>
    %cst_58 = arith.constant 0.000000e+00 : f32
    %79 = vector.broadcast %cst_58 : f32 to vector<2x128xf32>
    %80 = arith.maximumf %78, %79 : vector<2x128xf32>
    %81 = arith.addf %71, %80 : vector<2x128xf32>
    %cst_59 = arith.constant 0.000000e+00 : f32
    %82 = vector.broadcast %cst_59 : f32 to vector<2x128xf32>
    %83 = arith.maximumf %81, %82 : vector<2x128xf32>
    %c0_60 = arith.constant 0 : index
    %c0_61 = arith.constant 0 : index
    %84 = vector.load %arg8[%c0_60, %c0_61] : memref<128x4xf32, #tpu.memory_space<vmem>>, vector<128x4xf32>
    %cst_62 = arith.constant dense<0.000000e+00> : vector<2x4xf32>
    %85 = tpu.matmul %83, %84, %cst_62 {dimension_numbers = #tpu.dot_dimension_numbers<[1], [0], [0], [1], [0, 0, 1, 1], [], []>} : vector<2x128xf32>, vector<128x4xf32>, vector<2x4xf32> -> vector<2x4xf32>
    %c0_63 = arith.constant 0 : index
    %c0_64 = arith.constant 0 : index
    %86 = vector.load %arg9[%c0_63, %c0_64] : memref<1x4xf32, #tpu.memory_space<vmem>>, vector<1x4xf32>
    %87 = vector.broadcast %86 : vector<1x4xf32> to vector<2x4xf32>
    %88 = arith.addf %85, %87 : vector<2x4xf32>
    %c0_65 = arith.constant 0 : index
    %c0_66 = arith.constant 0 : index
    %89 = vector.load %arg10[%c0_65, %c0_66] : memref<2x4xf32, #tpu.memory_space<vmem>>, vector<2x4xf32>
    tpu.vector_store %arg10[%c0_65, %c0_66], %88 {strides = array<i32>} : memref<2x4xf32, #tpu.memory_space<vmem>>, vector<2x4xf32>,
    return
  }
  func.func @transform_0(%arg0: i32) -> (i32, i32) {
    %c0_i32 = arith.constant 0 : i32
    %c0_i32_0 = arith.constant 0 : i32
    return %arg0, %c0_i32 : i32, i32
  }
  func.func @transform_1(%arg0: i32) -> (i32, i32) {
    %c0_i32 = arith.constant 0 : i32
    %c0_i32_0 = arith.constant 0 : i32
    return %arg0, %c0_i32 : i32, i32
  }
  func.func @transform_2(%arg0: i32) -> (i32, i32) {
    %c0_i32 = arith.constant 0 : i32
    %c0_i32_0 = arith.constant 0 : i32
    %c0_i32_1 = arith.constant 0 : i32
    return %c0_i32, %c0_i32_0 : i32, i32
  }
  func.func @transform_3(%arg0: i32) -> (i32, i32) {
    %c0_i32 = arith.constant 0 : i32
    %c0_i32_0 = arith.constant 0 : i32
    %c0_i32_1 = arith.constant 0 : i32
    return %c0_i32, %c0_i32_0 : i32, i32
  }
  func.func @transform_4(%arg0: i32) -> (i32, i32) {
    %c0_i32 = arith.constant 0 : i32
    %c0_i32_0 = arith.constant 0 : i32
    %c0_i32_1 = arith.constant 0 : i32
    return %c0_i32, %c0_i32_0 : i32, i32
  }
  func.func @transform_5(%arg0: i32) -> (i32, i32, i32) {
    %c0_i32 = arith.constant 0 : i32
    %c0_i32_0 = arith.constant 0 : i32
    %c0_i32_1 = arith.constant 0 : i32
    %c0_i32_2 = arith.constant 0 : i32
    return %c0_i32, %c0_i32_0, %c0_i32_1 : i32, i32, i32
  }
  func.func @transform_6(%arg0: i32) -> (i32, i32, i32) {
    %c0_i32 = arith.constant 0 : i32
    %c0_i32_0 = arith.constant 0 : i32
    %c0_i32_1 = arith.constant 0 : i32
    %c0_i32_2 = arith.constant 0 : i32
    return %c0_i32, %c0_i32_0, %c0_i32_1 : i32, i32, i32
  }
  func.func @transform_7(%arg0: i32) -> (i32, i32) {
    %c0_i32 = arith.constant 0 : i32
    %c0_i32_0 = arith.constant 0 : i32
    %c0_i32_1 = arith.constant 0 : i32
    return %c0_i32, %c0_i32_0 : i32, i32
  }
  func.func @transform_8(%arg0: i32) -> (i32, i32) {
    %c0_i32 = arith.constant 0 : i32
    %c0_i32_0 = arith.constant 0 : i32
    %c0_i32_1 = arith.constant 0 : i32
    return %c0_i32, %c0_i32_0 : i32, i32
  }
  func.func @transform_9(%arg0: i32) -> (i32, i32) {
    %c0_i32 = arith.constant 0 : i32
    %c0_i32_0 = arith.constant 0 : i32
    return %arg0, %c0_i32 : i32, i32
  }
}

</mosaic_0001>

<llo_original>
// kernel: tpu_custom_call.1
$region0: #{tpu_custom_call.1}
  #allocation0 [shape = 'u32[]', space=smem, size = 0x4, offset = 0x4, fixed_abs, tag = 'smem constant byte address 0x4 - core index']
  #allocation1 [shape = 'u32[72,128]{1,0:T(1,128)}', space=vmem, size = 0x9000, scoped, tag = 'internal scratch']
  %s0 = inlined_call_operand.vmem [shape: f32[2,8], index: 0, kind: input, shape index: {}]
  %s1 = inlined_call_operand.vmem [shape: f32[2,8], index: 1, kind: input, shape index: {}]
  %s2 = inlined_call_operand.vmem [shape: f32[8,128], index: 2, kind: input, shape index: {}]
  %s3 = inlined_call_operand.vmem [shape: f32[8,128], index: 3, kind: input, shape index: {}]
  %s4 = inlined_call_operand.vmem [shape: f32[1,128], index: 4, kind: input, shape index: {}]
  %s5 = inlined_call_operand.hbm [shape: f32[6,128,128], index: 5, kind: input, shape index: {}]
  %s6 = inlined_call_operand.vmem [shape: f32[6,1,128], index: 6, kind: input, shape index: {}]
  %s7 = inlined_call_operand.vmem [shape: f32[128,4], index: 7, kind: input, shape index: {}]
  %s8 = inlined_call_operand.vmem [shape: f32[1,4], index: 8, kind: input, shape index: {}]
  %s9 = inlined_call_operand.hbm [shape: f32[2,4], index: 9, kind: output, shape index: {}]
  %s10 = sld [smem:[#allocation0]]
  $region50: #{tpu_custom_call.1} parent=0
    _
  %s12 = ssub.s32 1, %s10
  %s13 = scalar_select 0, %s12, %s10
  $region1: #{tpu_custom_call.1} parent=0
    #allocation2 [shape = 'u8[393216]{0}', space=vmem, size = 0x60000, scoped, tag = 'input window, operand 5, single buffered']
    #allocation3 [shape = 's32[1]{0}', space=sflag, size = 0x4, scoped, tag = 'scoped memory for tpu_custom_call.1']
    #allocation4 [shape = 's32[1]{0}', space=sflag, size = 0x4, scoped, tag = 'scoped memory for tpu_custom_call.1']
    #allocation5 [shape = 'u8[1024]{0}', space=vmem, size = 0x400, scoped, tag = 'output window, operand 0, single buffered']
    %14 = vsyncpa [#allocation3], 0
    %15 = vsyncpa [#allocation4], 0
    // Predicated region
    $region2: #{tpu_custom_call.1} parent=1 // pred_check
      _
    $region3: #{tpu_custom_call.1} parent=1 // pred_check_branch
      %17 = sbr.rel (0) target = $region5
    $region4: #{tpu_custom_call.1} parent=1 // pred_region
      _
    $region5: #{tpu_custom_call.1} parent=1 // pred_fallthru
      _
    // Predicated region
    $region6: #{tpu_custom_call.1} parent=1 // pred_check
      _
    $region7: #{tpu_custom_call.1} parent=1 // pred_check_branch
      %19 = sbr.rel (0) target = $region9
    $region8: #{tpu_custom_call.1} parent=1 // pred_region
      _
    $region9: #{tpu_custom_call.1} parent=1 // pred_fallthru
      _
    // Predicated region
    $region10: #{tpu_custom_call.1} parent=1 // pred_check
      _
    $region11: #{tpu_custom_call.1} parent=1 // pred_check_branch
      %21 = sbr.rel (0) target = $region13
    $region12: #{tpu_custom_call.1} parent=1 // pred_region
      _
    $region13: #{tpu_custom_call.1} parent=1 // pred_fallthru
      _
    // Predicated region
    $region14: #{tpu_custom_call.1} parent=1 // pred_check
      _
    $region15: #{tpu_custom_call.1} parent=1 // pred_check_branch
      %23 = sbr.rel (0) target = $region17
    $region16: #{tpu_custom_call.1} parent=1 // pred_region
      _
    $region17: #{tpu_custom_call.1} parent=1 // pred_fallthru
      _
    // Predicated region
    $region18: #{tpu_custom_call.1} parent=1 // pred_check
      _
    $region19: #{tpu_custom_call.1} parent=1 // pred_check_branch
      %25 = sbr.rel (0) target = $region21
    $region20: #{tpu_custom_call.1} parent=1 // pred_region
      _
    $region21: #{tpu_custom_call.1} parent=1 // pred_fallthru
      _
    // Predicated region
    $region22: #{tpu_custom_call.1} parent=1 // pred_check
      _
    $region23: #{tpu_custom_call.1} parent=1 // pred_check_branch
      %27 = sbr.rel (0) target = $region25
    $region24: #{tpu_custom_call.1} parent=1 // pred_region
      %29 = vsyncadd [#allocation3], 0
      %s30 = sshll.u32 %s5, 4
      %s31 = int_to_ptr.hbm [resolvable:$true] %s30
      %s32 = sshll.u32 [#allocation2], 4
      %s33 = int_to_ptr.vmem [resolvable:$true] %s32
      %38 = dma.hbm_to_vmem [thread:$0]  %s31, 12288, %s33, [#allocation3], 128, 128, 8
    $region25: #{tpu_custom_call.1} parent=1 // pred_fallthru
      _
    // Predicated region
    $region26: #{tpu_custom_call.1} parent=1 // pred_check
      _
    $region27: #{tpu_custom_call.1} parent=1 // pred_check_branch
      %40 = sbr.rel (0) target = $region29
    $region28: #{tpu_custom_call.1} parent=1 // pred_region
      _
    $region29: #{tpu_custom_call.1} parent=1 // pred_fallthru
      _
    // Predicated region
    $region30: #{tpu_custom_call.1} parent=1 // pred_check
      _
    $region31: #{tpu_custom_call.1} parent=1 // pred_check_branch
      %42 = sbr.rel (0) target = $region33
    $region32: #{tpu_custom_call.1} parent=1 // pred_region
      _
    $region33: #{tpu_custom_call.1} parent=1 // pred_fallthru
      _
    // Predicated region
    $region34: #{tpu_custom_call.1} parent=1 // pred_check
      _
    $region35: #{tpu_custom_call.1} parent=1 // pred_check_branch
      %44 = sbr.rel (0) target = $region37
    $region36: #{tpu_custom_call.1} parent=1 // pred_region
      _
    $region37: #{tpu_custom_call.1} parent=1 // pred_fallthru
      _
    // Predicated region
    $region38: #{tpu_custom_call.1} parent=1 // pred_check
      _
    $region39: #{tpu_custom_call.1} parent=1 // pred_check_branch
      %46 = sbr.rel (0) target = $region41
    $region40: #{tpu_custom_call.1} parent=1 // pred_region
      %48 = dma.done [#allocation3], 12288
    $region41: #{tpu_custom_call.1} parent=1 // pred_fallthru
      _
    %v49 = vld [vmem:[%s0] sm:$0x3]
    %v50 = vld [vmem:[%s1] sm:$0x3]
    %v51 = vld [vmem:[%s2] sm:$0xff]
    %v52 = vld [vmem:[%s3] sm:$0xff]
    %vm53 = vcmask 64512
    %v55 = vsel %vm53, %v50, 0
    %57 = vmatpush.msra.mxu0 0.0
    %58 = vmatpush.msra.mxu0 0.0
    %59 = vmatpush.msra.mxu0 0.0
    %60 = vmatpush.msra.mxu0 0.0
    %61 = vmatpush.msra.mxu0 0.0
    %62 = vmatpush.msra.mxu0 0.0
    %63 = vmatpush.msra.mxu0 0.0
    %64 = vmatpush.msra.mxu0 0.0
    %65 = vmatpush.msra.mxu0 0.0
    %66 = vmatpush.msra.mxu0 0.0
    %67 = vmatpush.msra.mxu0 0.0
    %68 = vmatpush.msra.mxu0 0.0
    %69 = vmatpush.msra.mxu0 0.0
    %70 = vmatpush.msra.mxu0 0.0
    %71 = vmatpush.msra.mxu0 0.0
    %72 = vmatpush.msra.mxu0 %v52
    %73 = vmatmul.f32.gmra.mxu0 %v55
    %v74 = vpop.f32.mrf.mxu0
    %v75 = vadd.f32 0.0, %v74
    %76 = vdwg.mxu0
    %v78 = vsel %vm53, %v49, 0
    %80 = vmatpush.msra.mxu0 0.0
    %81 = vmatpush.msra.mxu0 0.0
    %82 = vmatpush.msra.mxu0 0.0
    %83 = vmatpush.msra.mxu0 0.0
    %84 = vmatpush.msra.mxu0 0.0
    %85 = vmatpush.msra.mxu0 0.0
    %86 = vmatpush.msra.mxu0 0.0
    %87 = vmatpush.msra.mxu0 0.0
    %88 = vmatpush.msra.mxu0 0.0
    %89 = vmatpush.msra.mxu0 0.0
    %90 = vmatpush.msra.mxu0 0.0
    %91 = vmatpush.msra.mxu0 0.0
    %92 = vmatpush.msra.mxu0 0.0
    %93 = vmatpush.msra.mxu0 0.0
    %94 = vmatpush.msra.mxu0 0.0
    %95 = vmatpush.msra.mxu0 %v51
    %96 = vmatmul.f32.gmra.mxu0 %v78
    %v97 = vpop.f32.mrf.mxu0
    %v98 = vadd.f32 %v75, %v97
    %99 = vdwg.mxu0
    %v100 = vld [vmem:[%s4] sm:$0x1]
    %v102 = vperm.slane %v100, 0
    %v104 = vadd.f32 %v98, %v102
    %v105 = vmax.f32 %v104, 0.0
    %v106 = vld [vmem:[#allocation2] sm:$0xff]
    %v107 = vld [vmem:[#allocation2 + $0x8] sm:$0xff]
    %v108 = vld [vmem:[#allocation2 + $0x10] sm:$0xff]
    %v109 = vld [vmem:[#allocation2 + $0x18] sm:$0xff]
    %v110 = vld [vmem:[#allocation2 + $0x20] sm:$0xff]
    %v111 = vld [vmem:[#allocation2 + $0x28] sm:$0xff]
    %v112 = vld [vmem:[#allocation2 + $0x30] sm:$0xff]
    %v113 = vld [vmem:[#allocation2 + $0x38] sm:$0xff]
    %v114 = vld [vmem:[#allocation2 + $0x40] sm:$0xff]
    %v115 = vld [vmem:[#allocation2 + $0x48] sm:$0xff]
    %v116 = vld [vmem:[#allocation2 + $0x50] sm:$0xff]
    %v117 = vld [vmem:[#allocation2 + $0x58] sm:$0xff]
    %v118 = vld [vmem:[#allocation2 + $0x60] sm:$0xff]
    %v119 = vld [vmem:[#allocation2 + $0x68] sm:$0xff]
    %v120 = vld [vmem:[#allocation2 + $0x70] sm:$0xff]
    %v121 = vld [vmem:[#allocation2 + $0x78] sm:$0xff]
    %v122 = vld [vmem:[%s6] sm:$0x1]
    %v124 = vperm.slane %v122, 0
    %126 = vmatpush.msra.mxu0 %v121
    %127 = vmatpush.msra.mxu0 %v120
    %128 = vmatpush.msra.mxu0 %v119
    %129 = vmatpush.msra.mxu0 %v118
    %130 = vmatpush.msra.mxu0 %v117
    %131 = vmatpush.msra.mxu0 %v116
    %132 = vmatpush.msra.mxu0 %v115
    %133 = vmatpush.msra.mxu0 %v114
    %134 = vmatpush.msra.mxu0 %v113
    %135 = vmatpush.msra.mxu0 %v112
    %136 = vmatpush.msra.mxu0 %v111
    %137 = vmatpush.msra.mxu0 %v110
    %138 = vmatpush.msra.mxu0 %v109
    %139 = vmatpush.msra.mxu0 %v108
    %140 = vmatpush.msra.mxu0 %v107
    %141 = vmatpush.msra.mxu0 %v106
    %142 = vmatmul.f32.gmra.mxu0 %v105
    %v143 = vpop.f32.mrf.mxu0
    %v144 = vadd.f32 %v124, %v143
    %145 = vdwg.mxu0
    %v146 = vmax.f32 %v144, 0.0
    %v147 = vadd.f32 %v105, %v146
    %v148 = vmax.f32 %v147, 0.0
    %s149 = scalar_lea.vmem [#allocation2], 128
    %v150 = vld [vmem:[%s149] sm:$0xff]
    %v151 = vld [vmem:[%s149 + $0x8] sm:$0xff]
    %v152 = vld [vmem:[%s149 + $0x10] sm:$0xff]
    %v153 = vld [vmem:[%s149 + $0x18] sm:$0xff]
    %v154 = vld [vmem:[%s149 + $0x20] sm:$0xff]
    %v155 = vld [vmem:[%s149 + $0x28] sm:$0xff]
    %v156 = vld [vmem:[%s149 + $0x30] sm:$0xff]
    %v157 = vld [vmem:[%s149 + $0x38] sm:$0xff]
    %v158 = vld [vmem:[%s149 + $0x40] sm:$0xff]
    %v159 = vld [vmem:[%s149 + $0x48] sm:$0xff]
    %v160 = vld [vmem:[%s149 + $0x50] sm:$0xff]
    %v161 = vld [vmem:[%s149 + $0x58] sm:$0xff]
    %v162 = vld [vmem:[%s149 + $0x60] sm:$0xff]
    %v163 = vld [vmem:[%s149 + $0x68] sm:$0xff]
    %v164 = vld [vmem:[%s149 + $0x70] sm:$0xff]
    %v165 = vld [vmem:[%s149 + $0x78] sm:$0xff]
    %s166 = scalar_lea.vmem %s6, 1
    %v167 = vld [vmem:[%s166] sm:$0x1]
    %v169 = vperm.slane %v167, 0
    %171 = vmatpush.msra.mxu0 %v165
    %172 = vmatpush.msra.mxu0 %v164
    %173 = vmatpush.msra.mxu0 %v163
    %174 = vmatpush.msra.mxu0 %v162
    %175 = vmatpush.msra.mxu0 %v161
    %176 = vmatpush.msra.mxu0 %v160
    %177 = vmatpush.msra.mxu0 %v159
    %178 = vmatpush.msra.mxu0 %v158
    %179 = vmatpush.msra.mxu0 %v157
    %180 = vmatpush.msra.mxu0 %v156
    %181 = vmatpush.msra.mxu0 %v155
    %182 = vmatpush.msra.mxu0 %v154
    %183 = vmatpush.msra.mxu0 %v153
    %184 = vmatpush.msra.mxu0 %v152
    %185 = vmatpush.msra.mxu0 %v151
    %186 = vmatpush.msra.mxu0 %v150
    %187 = vmatmul.f32.gmra.mxu0 %v148
    %v188 = vpop.f32.mrf.mxu0
    %v189 = vadd.f32 %v169, %v188
    %190 = vdwg.mxu0
    %v191 = vmax.f32 %v189, 0.0
    %v192 = vadd.f32 %v148, %v191
    %v193 = vmax.f32 %v192, 0.0
    %s194 = scalar_lea.vmem [#allocation2], 256
    %v195 = vld [vmem:[%s194] sm:$0xff]
    %v196 = vld [vmem:[%s194 + $0x8] sm:$0xff]
    %v197 = vld [vmem:[%s194 + $0x10] sm:$0xff]
    %v198 = vld [vmem:[%s194 + $0x18] sm:$0xff]
    %v199 = vld [vmem:[%s194 + $0x20] sm:$0xff]
    %v200 = vld [vmem:[%s194 + $0x28] sm:$0xff]
    %v201 = vld [vmem:[%s194 + $0x30] sm:$0xff]
    %v202 = vld [vmem:[%s194 + $0x38] sm:$0xff]
    %v203 = vld [vmem:[%s194 + $0x40] sm:$0xff]
    %v204 = vld [vmem:[%s194 + $0x48] sm:$0xff]
    %v205 = vld [vmem:[%s194 + $0x50] sm:$0xff]
    %v206 = vld [vmem:[%s194 + $0x58] sm:$0xff]
    %v207 = vld [vmem:[%s194 + $0x60] sm:$0xff]
    %v208 = vld [vmem:[%s194 + $0x68] sm:$0xff]
    %v209 = vld [vmem:[%s194 + $0x70] sm:$0xff]
    %v210 = vld [vmem:[%s194 + $0x78] sm:$0xff]
    %s211 = scalar_lea.vmem %s6, 2
    %v212 = vld [vmem:[%s211] sm:$0x1]
    %v214 = vperm.slane %v212, 0
    %216 = vmatpush.msra.mxu0 %v210
    %217 = vmatpush.msra.mxu0 %v209
    %218 = vmatpush.msra.mxu0 %v208
    %219 = vmatpush.msra.mxu0 %v207
    %220 = vmatpush.msra.mxu0 %v206
    %221 = vmatpush.msra.mxu0 %v205
    %222 = vmatpush.msra.mxu0 %v204
    %223 = vmatpush.msra.mxu0 %v203
    %224 = vmatpush.msra.mxu0 %v202
    %225 = vmatpush.msra.mxu0 %v201
    %226 = vmatpush.msra.mxu0 %v200
    %227 = vmatpush.msra.mxu0 %v199
    %228 = vmatpush.msra.mxu0 %v198
    %229 = vmatpush.msra.mxu0 %v197
    %230 = vmatpush.msra.mxu0 %v196
    %231 = vmatpush.msra.mxu0 %v195
    %232 = vmatmul.f32.gmra.mxu0 %v193
    %v233 = vpop.f32.mrf.mxu0
    %v234 = vadd.f32 %v214, %v233
    %235 = vdwg.mxu0
    %v236 = vmax.f32 %v234, 0.0
    %v237 = vadd.f32 %v193, %v236
    %v238 = vmax.f32 %v237, 0.0
    %s239 = scalar_lea.vmem [#allocation2], 384
    %v240 = vld [vmem:[%s239] sm:$0xff]
    %v241 = vld [vmem:[%s239 + $0x8] sm:$0xff]
    %v242 = vld [vmem:[%s239 + $0x10] sm:$0xff]
    %v243 = vld [vmem:[%s239 + $0x18] sm:$0xff]
    %v244 = vld [vmem:[%s239 + $0x20] sm:$0xff]
    %v245 = vld [vmem:[%s239 + $0x28] sm:$0xff]
    %v246 = vld [vmem:[%s239 + $0x30] sm:$0xff]
    %v247 = vld [vmem:[%s239 + $0x38] sm:$0xff]
    %v248 = vld [vmem:[%s239 + $0x40] sm:$0xff]
    %v249 = vld [vmem:[%s239 + $0x48] sm:$0xff]
    %v250 = vld [vmem:[%s239 + $0x50] sm:$0xff]
    %v251 = vld [vmem:[%s239 + $0x58] sm:$0xff]
    %v252 = vld [vmem:[%s239 + $0x60] sm:$0xff]
    %v253 = vld [vmem:[%s239 + $0x68] sm:$0xff]
    %v254 = vld [vmem:[%s239 + $0x70] sm:$0xff]
    %v255 = vld [vmem:[%s239 + $0x78] sm:$0xff]
    %s256 = scalar_lea.vmem %s6, 3
    %v257 = vld [vmem:[%s256] sm:$0x1]
    %v259 = vperm.slane %v257, 0
    %261 = vmatpush.msra.mxu0 %v255
    %262 = vmatpush.msra.mxu0 %v254
    %263 = vmatpush.msra.mxu0 %v253
    %264 = vmatpush.msra.mxu0 %v252
    %265 = vmatpush.msra.mxu0 %v251
    %266 = vmatpush.msra.mxu0 %v250
    %267 = vmatpush.msra.mxu0 %v249
    %268 = vmatpush.msra.mxu0 %v248
    %269 = vmatpush.msra.mxu0 %v247
    %270 = vmatpush.msra.mxu0 %v246
    %271 = vmatpush.msra.mxu0 %v245
    %272 = vmatpush.msra.mxu0 %v244
    %273 = vmatpush.msra.mxu0 %v243
    %274 = vmatpush.msra.mxu0 %v242
    %275 = vmatpush.msra.mxu0 %v241
    %276 = vmatpush.msra.mxu0 %v240
    %277 = vmatmul.f32.gmra.mxu0 %v238
    %v278 = vpop.f32.mrf.mxu0
    %v279 = vadd.f32 %v259, %v278
    %280 = vdwg.mxu0
    %v281 = vmax.f32 %v279, 0.0
    %v282 = vadd.f32 %v238, %v281
    %v283 = vmax.f32 %v282, 0.0
    %s284 = scalar_lea.vmem [#allocation2], 512
    %v285 = vld [vmem:[%s284] sm:$0xff]
    %v286 = vld [vmem:[%s284 + $0x8] sm:$0xff]
    %v287 = vld [vmem:[%s284 + $0x10] sm:$0xff]
    %v288 = vld [vmem:[%s284 + $0x18] sm:$0xff]
    %v289 = vld [vmem:[%s284 + $0x20] sm:$0xff]
    %v290 = vld [vmem:[%s284 + $0x28] sm:$0xff]
    %v291 = vld [vmem:[%s284 + $0x30] sm:$0xff]
    %v292 = vld [vmem:[%s284 + $0x38] sm:$0xff]
    %v293 = vld [vmem:[%s284 + $0x40] sm:$0xff]
    %v294 = vld [vmem:[%s284 + $0x48] sm:$0xff]
    %v295 = vld [vmem:[%s284 + $0x50] sm:$0xff]
    %v296 = vld [vmem:[%s284 + $0x58] sm:$0xff]
    %v297 = vld [vmem:[%s284 + $0x60] sm:$0xff]
    %v298 = vld [vmem:[%s284 + $0x68] sm:$0xff]
    %v299 = vld [vmem:[%s284 + $0x70] sm:$0xff]
    %v300 = vld [vmem:[%s284 + $0x78] sm:$0xff]
    %s301 = scalar_lea.vmem %s6, 4
    %v302 = vld [vmem:[%s301] sm:$0x1]
    %v304 = vperm.slane %v302, 0
    %306 = vmatpush.msra.mxu0 %v300
    %307 = vmatpush.msra.mxu0 %v299
    %308 = vmatpush.msra.mxu0 %v298
    %309 = vmatpush.msra.mxu0 %v297
    %310 = vmatpush.msra.mxu0 %v296
    %311 = vmatpush.msra.mxu0 %v295
    %312 = vmatpush.msra.mxu0 %v294
    %313 = vmatpush.msra.mxu0 %v293
    %314 = vmatpush.msra.mxu0 %v292
    %315 = vmatpush.msra.mxu0 %v291
    %316 = vmatpush.msra.mxu0 %v290
    %317 = vmatpush.msra.mxu0 %v289
    %318 = vmatpush.msra.mxu0 %v288
    %319 = vmatpush.msra.mxu0 %v287
    %320 = vmatpush.msra.mxu0 %v286
    %321 = vmatpush.msra.mxu0 %v285
    %322 = vmatmul.f32.gmra.mxu0 %v283
    %v323 = vpop.f32.mrf.mxu0
    %v324 = vadd.f32 %v304, %v323
    %325 = vdwg.mxu0
    %v326 = vmax.f32 %v324, 0.0
    %v327 = vadd.f32 %v283, %v326
    %v328 = vmax.f32 %v327, 0.0
    %s329 = scalar_lea.vmem [#allocation2], 640
    %v330 = vld [vmem:[%s329] sm:$0xff]
    %v331 = vld [vmem:[%s329 + $0x8] sm:$0xff]
    %v332 = vld [vmem:[%s329 + $0x10] sm:$0xff]
    %v333 = vld [vmem:[%s329 + $0x18] sm:$0xff]
    %v334 = vld [vmem:[%s329 + $0x20] sm:$0xff]
    %v335 = vld [vmem:[%s329 + $0x28] sm:$0xff]
    %v336 = vld [vmem:[%s329 + $0x30] sm:$0xff]
    %v337 = vld [vmem:[%s329 + $0x38] sm:$0xff]
    %v338 = vld [vmem:[%s329 + $0x40] sm:$0xff]
    %v339 = vld [vmem:[%s329 + $0x48] sm:$0xff]
    %v340 = vld [vmem:[%s329 + $0x50] sm:$0xff]
    %v341 = vld [vmem:[%s329 + $0x58] sm:$0xff]
    %v342 = vld [vmem:[%s329 + $0x60] sm:$0xff]
    %v343 = vld [vmem:[%s329 + $0x68] sm:$0xff]
    %v344 = vld [vmem:[%s329 + $0x70] sm:$0xff]
    %v345 = vld [vmem:[%s329 + $0x78] sm:$0xff]
    %s346 = scalar_lea.vmem %s6, 5
    %v347 = vld [vmem:[%s346] sm:$0x1]
    %v349 = vperm.slane %v347, 0
    %351 = vmatpush.msra.mxu0 %v345
    %352 = vmatpush.msra.mxu0 %v344
    %353 = vmatpush.msra.mxu0 %v343
    %354 = vmatpush.msra.mxu0 %v342
    %355 = vmatpush.msra.mxu0 %v341
    %356 = vmatpush.msra.mxu0 %v340
    %357 = vmatpush.msra.mxu0 %v339
    %358 = vmatpush.msra.mxu0 %v338
    %359 = vmatpush.msra.mxu0 %v337
    %360 = vmatpush.msra.mxu0 %v336
    %361 = vmatpush.msra.mxu0 %v335
    %362 = vmatpush.msra.mxu0 %v334
    %363 = vmatpush.msra.mxu0 %v333
    %364 = vmatpush.msra.mxu0 %v332
    %365 = vmatpush.msra.mxu0 %v331
    %366 = vmatpush.msra.mxu0 %v330
    %367 = vmatmul.f32.gmra.mxu0 %v328
    %v368 = vpop.f32.mrf.mxu0
    %v369 = vadd.f32 %v349, %v368
    %370 = vdwg.mxu0
    %v371 = vmax.f32 %v369, 0.0
    %v372 = vadd.f32 %v328, %v371
    %v373 = vmax.f32 %v372, 0.0
    %v374 = vld [vmem:[%s7] sm:$0xff]
    %v375 = vld [vmem:[%s7 + $0x8] sm:$0xff]
    %v376 = vld [vmem:[%s7 + $0x10] sm:$0xff]
    %v377 = vld [vmem:[%s7 + $0x18] sm:$0xff]
    %v378 = vld [vmem:[%s7 + $0x20] sm:$0xff]
    %v379 = vld [vmem:[%s7 + $0x28] sm:$0xff]
    %v380 = vld [vmem:[%s7 + $0x30] sm:$0xff]
    %v381 = vld [vmem:[%s7 + $0x38] sm:$0xff]
    %v382 = vld [vmem:[%s7 + $0x40] sm:$0xff]
    %v383 = vld [vmem:[%s7 + $0x48] sm:$0xff]
    %v384 = vld [vmem:[%s7 + $0x50] sm:$0xff]
    %v385 = vld [vmem:[%s7 + $0x58] sm:$0xff]
    %v386 = vld [vmem:[%s7 + $0x60] sm:$0xff]
    %v387 = vld [vmem:[%s7 + $0x68] sm:$0xff]
    %v388 = vld [vmem:[%s7 + $0x70] sm:$0xff]
    %v389 = vld [vmem:[%s7 + $0x78] sm:$0xff]
    %v390 = vld [vmem:[%s8] sm:$0x1]
    %v392 = vperm.slane %v390, 0
    %394 = vmatpush.msra.mxu0 %v389
    %395 = vmatpush.msra.mxu0 %v388
    %396 = vmatpush.msra.mxu0 %v387
    %397 = vmatpush.msra.mxu0 %v386
    %398 = vmatpush.msra.mxu0 %v385
    %399 = vmatpush.msra.mxu0 %v384
    %400 = vmatpush.msra.mxu0 %v383
    %401 = vmatpush.msra.mxu0 %v382
    %402 = vmatpush.msra.mxu0 %v381
    %403 = vmatpush.msra.mxu0 %v380
    %404 = vmatpush.msra.mxu0 %v379
    %405 = vmatpush.msra.mxu0 %v378
    %406 = vmatpush.msra.mxu0 %v377
    %407 = vmatpush.msra.mxu0 %v376
    %408 = vmatpush.msra.mxu0 %v375
    %409 = vmatpush.msra.mxu0 %v374
    %410 = vmatmul.f32.gmra.mxu0 %v373
    %v411 = vpop.f32.mrf.mxu0
    %v412 = vadd.f32 %v392, %v411
    %413 = vdwg.mxu0
    %vm414 = vcmask 25600
    %415 = vst.msk [vmem:[#allocation5] sm:$0x3] %vm414, %v412
    // Predicated region
    $region42: #{tpu_custom_call.1} parent=1 // pred_check
      _
    $region43: #{tpu_custom_call.1} parent=1 // pred_check_branch
      %417 = sbr.rel (0) target = $region45
    $region44: #{tpu_custom_call.1} parent=1 // pred_region
      %419 = vsyncadd [#allocation4], 0
      %s421 = sshll.u32 [#allocation5], 4
      %s422 = int_to_ptr.vmem [resolvable:$true] %s421
      %s423 = sshll.u32 %s9, 4
      %s424 = int_to_ptr.hbm [resolvable:$true] %s423
      %426 = dma.vmem_to_hbm [thread:$0]  %s422, 32, %s424, [#allocation4]
    $region45: #{tpu_custom_call.1} parent=1 // pred_fallthru
      _
    // Predicated region
    $region46: #{tpu_custom_call.1} parent=1 // pred_check
      _
    $region47: #{tpu_custom_call.1} parent=1 // pred_check_branch
      %428 = sbr.rel (0) target = $region49
    $region48: #{tpu_custom_call.1} parent=1 // pred_region
      %430 = dma.done [#allocation4], 32
    $region49: #{tpu_custom_call.1} parent=1 // pred_fallthru
      _
    %431 = vsyncpa [#allocation3], 1
    %432 = vsyncpa [#allocation4], 1

</llo_original>
